<compile_context>
chip_gen: v5e
topology: v5e:2x2
jax: 0.10.0
libtpu: 0.0.40
codegen_flags: <defaults>
</compile_context>

<pallas_src>
import jax
import jax.numpy as jnp
from jax.experimental import pallas as pl
from jax.experimental.pallas import tpu as pltpu


def _nsp_kernel(x_ref, wd_ref, bd_ref, o_ref):
    # x_ref: [tb, H] CLS rows (native dtype); wd_ref: [H, 1] class-diff weights;
    # bd_ref: [1, 1] f32 class-diff bias; o_ref: [tb, 2] f32 log-probs.
    d = jnp.dot(x_ref[...], wd_ref[...], preferred_element_type=jnp.float32)
    d = d + bd_ref[...]                                   # [tb, 1] difference logit

    # Exact 2-class log-softmax: logp0 = -softplus(-d), logp1 = -softplus(d),
    # with the numerically stable softplus(z) = max(z, 0) + log1p(exp(-|z|)).
    # The log1p term is shared between softplus(d) and softplus(-d).
    log1p_term = jnp.log1p(jnp.exp(-jnp.abs(d)))
    sp_pos = jnp.maximum(d, 0.0) + log1p_term             # softplus(d)
    sp_neg = jnp.maximum(-d, 0.0) + log1p_term            # softplus(-d)
    o_ref[...] = jnp.concatenate([-sp_neg, -sp_pos], axis=-1).astype(o_ref.dtype)


def prepare_nsp_params(weight, bias, activation_dtype=jnp.float32):
    """One-time parameter prep (hoist out of the per-call path).

    weight: [2, H], bias: [2]  ->  (w_d [H, 1] in activation dtype, b_d [1, 1] f32).
    The 2-class log-softmax depends only on the class-difference logit, so this
    fold is mathematically exact.
    """
    w_d = (weight[0] - weight[1]).astype(activation_dtype).reshape(-1, 1)
    b_d = (bias[0] - bias[1]).astype(jnp.float32).reshape(1, 1)
    return w_d, b_d


_VMEM_LIMIT_BYTES = 48 * 1024 * 1024   # < v7x's 64 MiB physical, leaves headroom


def _sublane_multiple(itemsize):
    # Native packed sublane tile: f32 -> 8, bf16 -> 16, int8/fp8 -> 32.
    return {4: 8, 2: 16, 1: 32}.get(itemsize, 8)


def _round_up(x, m):
    return ((x + m - 1) // m) * m


def _choose_batch_tile(batch, hidden, itemsize):
    """Largest dtype-aligned batch tile within a ~16 MiB per-step VMEM budget.

    Budget counts the double-buffered x tile plus the double-buffered output
    tile, which is lane-padded to 128 f32 lanes in VMEM (tb*128*4 B per buffer).
    """
    budget = 16 * 1024 * 1024
    mult = _sublane_multiple(itemsize)
    per_row = 2 * hidden * itemsize + 2 * 128 * 4
    cap = max(mult, (budget // per_row // mult) * mult)
    cap = min(cap, 8192)
    if batch > cap:
        return cap
    if batch >= 256:
        # Guarantee >= 2 grid steps so the "parallel" batch axis can shard
        # across v7x's two TensorCores; tiny batches stay a single step.
        return min(cap, _round_up(pl.cdiv(batch, 2), mult))
    return batch


def next_sentence_prediction(x, w_d, b_d, *, batch_tile=None):
    """x: [B, S, H] encoder output; (w_d, b_d) from prepare_nsp_params.

    Returns log-probs [B, 2] in float32 (matches LogSoftmax(Linear(x[:, 0]))).
    """
    B, S, H = x.shape
    itemsize = x.dtype.itemsize
    tb = batch_tile if batch_tile is not None else _choose_batch_tile(B, H, itemsize)
    grid = (pl.cdiv(B, tb),)

    # Fold the CLS gather into the pipeline only when the per-row strided DMA
    # chunk is >= 512 B; smaller chunks lose burst efficiency (worst on v5e),
    # so fall back to a contiguous wrapper-side slice there.
    if H * itemsize >= 512:
        x_in = x
        x_spec = pl.BlockSpec((tb, None, H), lambda i: (i, 0, 0))
    else:
        x_in = x[:, 0, :]
        x_spec = pl.BlockSpec((tb, H), lambda i: (i, 0))

    cost = pl.CostEstimate(
        flops=2 * B * H + 6 * B,                     # [B,H]@[H,1] + closed-form tail
        transcendentals=2 * B,                       # exp + log1p per row
        bytes_accessed=B * H * itemsize              # CLS rows streamed once
        + H * itemsize                               # folded weight (resident)
        + B * 2 * 4,                                 # f32 output
    )

    return pl.pallas_call(
        _nsp_kernel,
        out_shape=jax.ShapeDtypeStruct((B, 2), jnp.float32),
        grid=grid,
        in_specs=[
            x_spec,
            # Folded weight / bias stay resident across the grid (constant block index).
            pl.BlockSpec((H, 1), lambda i: (0, 0)),
            pl.BlockSpec((1, 1), lambda i: (0, 0)),
        ],
        out_specs=pl.BlockSpec((tb, 2), lambda i: (i, 0)),
        compiler_params=pltpu.CompilerParams(
            dimension_semantics=("parallel",),
            vmem_limit_bytes=_VMEM_LIMIT_BYTES,
        ),
        cost_estimate=cost,
    )(x_in, w_d, b_d)
    # NOTE: for tiny production batches this head should be fused into the
    # encoder's final Pallas kernel (or the pooler) rather than run standalone;
    # launch + single-step overhead dominates at that size.


if __name__ == "__main__":
    # Small shapes: batch=2, seq=8, hidden=32 (BERT output size).
    B, S, H = 2, 8, 32
    key = jax.random.PRNGKey(0)
    kx, kw, kb = jax.random.split(key, 3)

    x = jax.random.normal(kx, (B, S, H), dtype=jnp.float32)
    bound = 1.0 / (H ** 0.5)
    weight = jax.random.uniform(kw, (2, H), jnp.float32, minval=-bound, maxval=bound)
    bias = jax.random.uniform(kb, (2,), jnp.float32, minval=-bound, maxval=bound)

    w_d, b_d = prepare_nsp_params(weight, bias, x.dtype)   # one-time prep
    out = next_sentence_prediction(x, w_d, b_d)
    jax.block_until_ready(out)

    ref = jax.nn.log_softmax(x[:, 0, :] @ weight.T + bias, axis=-1)
    assert out.shape == (B, 2)
    assert jnp.allclose(out, ref, atol=1e-4, rtol=1e-4)

    # Larger hidden exercises the folded CLS gather (H*itemsize >= 512 B) and a
    # multi-step batch grid, while staying small.
    B2, H2 = 16, 256
    k2x, k2w, k2b = jax.random.split(jax.random.PRNGKey(1), 3)
    x2 = jax.random.normal(k2x, (B2, S, H2), dtype=jnp.float32)
    bound2 = 1.0 / (H2 ** 0.5)
    weight2 = jax.random.uniform(k2w, (2, H2), jnp.float32, minval=-bound2, maxval=bound2)
    bias2 = jax.random.uniform(k2b, (2,), jnp.float32, minval=-bound2, maxval=bound2)

    w2_d, b2_d = prepare_nsp_params(weight2, bias2, x2.dtype)
    out2 = next_sentence_prediction(x2, w2_d, b2_d, batch_tile=8)
    jax.block_until_ready(out2)
    ref2 = jax.nn.log_softmax(x2[:, 0, :] @ weight2.T + bias2, axis=-1)
    assert out2.shape == (B2, 2)
    assert jnp.allclose(out2, ref2, atol=1e-4, rtol=1e-4)

    print("KERNEL_OK")
</pallas_src>

<mosaic_0001>
module attributes {stable_mosaic.version = 11 : i64} {
  func.func @_nsp_kernel(%arg0: i32, %arg1: memref<2x32xf32, #tpu.memory_space<vmem>>, %arg2: memref<32x1xf32, #tpu.memory_space<vmem>>, %arg3: memref<1x1xf32, #tpu.memory_space<vmem>>, %arg4: memref<2x2xf32, #tpu.memory_space<vmem>>) attributes {dimension_semantics = [#tpu.dimension_semantics<parallel>], iteration_bounds = array<i64: 1>, scalar_prefetch = 0 : i64, scratch_operands = 0 : i64, tpu.core_type = #tpu.core_type<tc>, window_params = [{transform_indices = @transform_0, window_bounds = array<i64: 2, 32>}, {pipeline_mode = #tpu.pipeline_mode<synchronous>, transform_indices = @transform_1, window_bounds = array<i64: 32, 1>}, {pipeline_mode = #tpu.pipeline_mode<synchronous>, transform_indices = @transform_2, window_bounds = array<i64: 1, 1>}, {transform_indices = @transform_3, window_bounds = array<i64: 2, 2>}]} {
    %c0 = arith.constant 0 : index
    %c0_0 = arith.constant 0 : index
    %0 = vector.load %arg1[%c0, %c0_0] : memref<2x32xf32, #tpu.memory_space<vmem>>, vector<2x32xf32>
    %c0_1 = arith.constant 0 : index
    %c0_2 = arith.constant 0 : index
    %1 = vector.load %arg2[%c0_1, %c0_2] : memref<32x1xf32, #tpu.memory_space<vmem>>, vector<32x1xf32>
    %cst = arith.constant dense<0.000000e+00> : vector<2x1xf32>
    %2 = tpu.matmul %0, %1, %cst {dimension_numbers = #tpu.dot_dimension_numbers<[1], [0], [0], [1], [0, 0, 1, 1], [], []>} : vector<2x32xf32>, vector<32x1xf32>, vector<2x1xf32> -> vector<2x1xf32>
    %c0_3 = arith.constant 0 : index
    %c0_4 = arith.constant 0 : index
    %3 = vector.load %arg3[%c0_3, %c0_4] : memref<1x1xf32, #tpu.memory_space<vmem>>, vector<1x1xf32>
    %4 = vector.broadcast %3 : vector<1x1xf32> to vector<2x1xf32>
    %5 = arith.addf %2, %4 : vector<2x1xf32>
    %6 = math.absf %5 : vector<2x1xf32>
    %cst_5 = arith.constant 0.000000e+00 : f32
    %7 = vector.broadcast %cst_5 : f32 to vector<2x1xf32>
    %8 = arith.subf %7, %6 : vector<2x1xf32>
    %9 = math.exp %8 : vector<2x1xf32>
    %10 = math.log1p %9 : vector<2x1xf32>
    %cst_6 = arith.constant 0.000000e+00 : f32
    %11 = vector.broadcast %cst_6 : f32 to vector<2x1xf32>
    %12 = arith.maximumf %5, %11 : vector<2x1xf32>
    %13 = arith.addf %12, %10 : vector<2x1xf32>
    %cst_7 = arith.constant 0.000000e+00 : f32
    %14 = vector.broadcast %cst_7 : f32 to vector<2x1xf32>
    %15 = arith.subf %14, %5 : vector<2x1xf32>
    %cst_8 = arith.constant 0.000000e+00 : f32
    %16 = vector.broadcast %cst_8 : f32 to vector<2x1xf32>
    %17 = arith.maximumf %15, %16 : vector<2x1xf32>
    %18 = arith.addf %17, %10 : vector<2x1xf32>
    %cst_9 = arith.constant 0.000000e+00 : f32
    %19 = vector.broadcast %cst_9 : f32 to vector<2x1xf32>
    %20 = arith.subf %19, %18 : vector<2x1xf32>
    %cst_10 = arith.constant 0.000000e+00 : f32
    %21 = vector.broadcast %cst_10 : f32 to vector<2x1xf32>
    %22 = arith.subf %21, %13 : vector<2x1xf32>
    %23 = tpu.concatenate %20, %22 in 1 : vector<2x1xf32>, vector<2x1xf32> -> vector<2x2xf32>
    %c0_11 = arith.constant 0 : index
    %c0_12 = arith.constant 0 : index
    %24 = vector.load %arg4[%c0_11, %c0_12] : memref<2x2xf32, #tpu.memory_space<vmem>>, vector<2x2xf32>
    tpu.vector_store %arg4[%c0_11, %c0_12], %23 {strides = array<i32>} : memref<2x2xf32, #tpu.memory_space<vmem>>, vector<2x2xf32>,
    return
  }
  func.func @transform_0(%arg0: i32) -> (i32, i32) {
    %c0_i32 = arith.constant 0 : i32
    %c0_i32_0 = arith.constant 0 : i32
    return %arg0, %c0_i32 : i32, i32
  }
  func.func @transform_1(%arg0: i32) -> (i32, i32) {
    %c0_i32 = arith.constant 0 : i32
    %c0_i32_0 = arith.constant 0 : i32
    %c0_i32_1 = arith.constant 0 : i32
    return %c0_i32, %c0_i32_0 : i32, i32
  }
  func.func @transform_2(%arg0: i32) -> (i32, i32) {
    %c0_i32 = arith.constant 0 : i32
    %c0_i32_0 = arith.constant 0 : i32
    %c0_i32_1 = arith.constant 0 : i32
    return %c0_i32, %c0_i32_0 : i32, i32
  }
  func.func @transform_3(%arg0: i32) -> (i32, i32) {
    %c0_i32 = arith.constant 0 : i32
    %c0_i32_0 = arith.constant 0 : i32
    return %arg0, %c0_i32 : i32, i32
  }
}

</mosaic_0001>

<llo_original>
// kernel: tpu_custom_call.1
$region0: #{tpu_custom_call.1}
  #allocation0 [shape = 'u32[]', space=smem, size = 0x4, offset = 0x4, fixed_abs, tag = 'smem constant byte address 0x4 - core index']
  #allocation1 [shape = 'u32[72,128]{1,0:T(1,128)}', space=vmem, size = 0x9000, scoped, tag = 'internal scratch']
  #allocation2 [shape = 'f32[1,1]{1,0:T(1,128)S(1)}', space=vmem, size = 0x200, scoped, tag = 'scoped memory for tpu_custom_call.1']
  %s0 = inlined_call_operand.vmem [shape: f32[2,32], index: 0, kind: input, shape index: {}]
  %s1 = inlined_call_operand.vmem [shape: f32[32,1], index: 1, kind: input, shape index: {}]
  %s2 = inlined_call_operand.<no memory space> [shape: f32[1,1], index: 2, kind: input, shape index: {}]
  %s3 = inlined_call_operand.hbm [shape: f32[2,2], index: 3, kind: output, shape index: {}]
  %s4 = sld [smem:[#allocation0]]
  $region22: #{tpu_custom_call.1} parent=0
    _
  %s6 = ssub.s32 1, %s4
  %s7 = scalar_select 0, %s6, %s4
  %v8 = vstv %s2
  %9 = vst [vmem:[#allocation2] sm:$0x1] %v8
  $region1: #{tpu_custom_call.1} parent=0
    #allocation3 [shape = 'u8[1024]{0}', space=vmem, size = 0x400, scoped, tag = 'output window, operand 0, single buffered']
    #allocation4 [shape = 's32[1]{0}', space=sflag, size = 0x4, scoped, tag = 'scoped memory for tpu_custom_call.1']
    %10 = vsyncpa [#allocation4], 0
    // Predicated region
    $region2: #{tpu_custom_call.1} parent=1 // pred_check
      _
    $region3: #{tpu_custom_call.1} parent=1 // pred_check_branch
      %12 = sbr.rel (0) target = $region5
    $region4: #{tpu_custom_call.1} parent=1 // pred_region
      _
    $region5: #{tpu_custom_call.1} parent=1 // pred_fallthru
      _
    // Predicated region
    $region6: #{tpu_custom_call.1} parent=1 // pred_check
      _
    $region7: #{tpu_custom_call.1} parent=1 // pred_check_branch
      %14 = sbr.rel (0) target = $region9
    $region8: #{tpu_custom_call.1} parent=1 // pred_region
      _
    $region9: #{tpu_custom_call.1} parent=1 // pred_fallthru
      _
    // Predicated region
    $region10: #{tpu_custom_call.1} parent=1 // pred_check
      _
    $region11: #{tpu_custom_call.1} parent=1 // pred_check_branch
      %16 = sbr.rel (0) target = $region13
    $region12: #{tpu_custom_call.1} parent=1 // pred_region
      _
    $region13: #{tpu_custom_call.1} parent=1 // pred_fallthru
      _
    %v17 = vld [vmem:[%s0] sm:$0x3]
    %v18 = vld [vmem:[%s1] sm:$0xff]
    %v19 = vld [vmem:[%s1 + $0x8] sm:$0xff]
    %v20 = vld [vmem:[%s1 + $0x10] sm:$0xff]
    %v21 = vld [vmem:[%s1 + $0x18] sm:$0xff]
    %v22 = vld [vmem:[#allocation2] sm:$0x1]
    %v24 = vperm.slane %v22, 0
    %vm26 = vcmask 261120
    %v28 = vsel %vm26, %v17, 0
    %30 = vmatpush.msra.mxu0 0.0
    %31 = vmatpush.msra.mxu0 0.0
    %32 = vmatpush.msra.mxu0 0.0
    %33 = vmatpush.msra.mxu0 0.0
    %34 = vmatpush.msra.mxu0 0.0
    %35 = vmatpush.msra.mxu0 0.0
    %36 = vmatpush.msra.mxu0 0.0
    %37 = vmatpush.msra.mxu0 0.0
    %38 = vmatpush.msra.mxu0 0.0
    %39 = vmatpush.msra.mxu0 0.0
    %40 = vmatpush.msra.mxu0 0.0
    %41 = vmatpush.msra.mxu0 0.0
    %42 = vmatpush.msra.mxu0 %v21
    %43 = vmatpush.msra.mxu0 %v20
    %44 = vmatpush.msra.mxu0 %v19
    %45 = vmatpush.msra.mxu0 %v18
    %46 = vmatmul.f32.gmra.mxu0 %v28
    %v47 = vpop.f32.mrf.mxu0
    %v48 = vadd.f32 %v24, %v47
    %49 = vdwg.mxu0
    %v50 = vand.u32 2147483647, %v48
    %v51 = vsub.f32 0.0, %v50
    %v52 = vmul.f32 %v51, 1.442695
    %v53 = vpow.pop %v52
    %v54 = vadd.f32 %v53, 1.0
    %v55 = vlog2.pop %v54
    %v56 = vmul.f32 %v55, 0.6931472
    %v57 = vmul.f32 -0.5, %v53
    %v58 = vadd.f32 %v57, 1.0
    %v59 = vmul.f32 %v58, %v53
    %v60 = vand.u32 2147483647, %v53
    %vm61 = vcmp.lt.f32.partialorder %v60, 0.0004427343
    %v62 = vsel %vm61, %v59, %v56
    %v63 = vmax.f32 %v48, 0.0
    %v64 = vadd.f32 %v63, %v62
    %v65 = vsub.f32 0.0, %v48
    %v66 = vmax.f32 %v65, 0.0
    %v67 = vadd.f32 %v66, %v62
    %v68 = vsub.f32 0.0, %v67
    %v69 = vsub.f32 0.0, %v64
    %71 = vrot.lane.b32.xlu0 %v69, 1
    %v72 = vpop.permute.xlu0 %71
    %vm74 = vcmask 7168
    %v75 = vsel %vm74, %v68, %v72
    %vm76 = vcmask 9216
    %77 = vst.msk [vmem:[#allocation3] sm:$0x3] %vm76, %v75
    // Predicated region
    $region14: #{tpu_custom_call.1} parent=1 // pred_check
      _
    $region15: #{tpu_custom_call.1} parent=1 // pred_check_branch
      %79 = sbr.rel (0) target = $region17
    $region16: #{tpu_custom_call.1} parent=1 // pred_region
      %81 = vsyncadd [#allocation4], 0
      %s83 = sshll.u32 [#allocation3], 4
      %s84 = int_to_ptr.vmem [resolvable:$true] %s83
      %s85 = sshll.u32 %s3, 4
      %s86 = int_to_ptr.hbm [resolvable:$true] %s85
      %88 = dma.vmem_to_hbm [thread:$0]  %s84, 32, %s86, [#allocation4]
    $region17: #{tpu_custom_call.1} parent=1 // pred_fallthru
      _
    // Predicated region
    $region18: #{tpu_custom_call.1} parent=1 // pred_check
      _
    $region19: #{tpu_custom_call.1} parent=1 // pred_check_branch
      %90 = sbr.rel (0) target = $region21
    $region20: #{tpu_custom_call.1} parent=1 // pred_region
      %92 = dma.done [#allocation4], 32
    $region21: #{tpu_custom_call.1} parent=1 // pred_fallthru
      _
    %93 = vsyncpa [#allocation4], 1

</llo_original>
